<compile_context>
chip_gen: v7x
topology: tpu7x:2x2x1
jax: 0.10.0
libtpu: 0.0.40
codegen_flags: <defaults>
</compile_context>

<pallas_src>
import numpy as np
import jax
import jax.numpy as jnp
from jax.experimental import pallas as pl
from jax.experimental.pallas import tpu as pltpu


# ----------------------------------------------------------------------------
# Glue: align_corners=True bilinear interpolation matrix (out_size x in_size)
# ----------------------------------------------------------------------------
def _interp_matrix_np(out_size: int, in_size: int) -> np.ndarray:
    if in_size == 1 or out_size == 1:
        # degenerate: every output row maps to input 0 (align_corners=True)
        A = np.zeros((out_size, in_size), dtype=np.float64)
        A[:, 0] = 1.0
        return A
    f = np.arange(out_size, dtype=np.float64) * (in_size - 1) / (out_size - 1)
    i0 = np.clip(np.floor(f).astype(np.int64), 0, in_size - 2)
    r = f - i0
    A = np.zeros((out_size, in_size), dtype=np.float64)
    A[np.arange(out_size), i0] = 1.0 - r
    A[np.arange(out_size), i0 + 1] += r
    return A


def _fused_interp_operator(H: int, W: int, gh: int, gw: int) -> jnp.ndarray:
    """K of shape (gh*gw, H*W) with K[i*gw+j, y*W+x] = Ay[y, i] * Ax[x, j]."""
    ay = _interp_matrix_np(H, gh)            # (H, gh)
    ax = _interp_matrix_np(W, gw)            # (W, gw)
    K = np.kron(ay, ax).T                    # (gh*gw, H*W)
    return jnp.asarray(K, dtype=jnp.float32)


# ----------------------------------------------------------------------------
# Pallas kernel: single grid step, whole batch, lane-dense flattened output
# ----------------------------------------------------------------------------
def _mesh_deform_kernel(mesh_ref, k_ref, depth_ref, out_ref):
    # mesh_ref:  (B, gh*gw)    f32
    # k_ref:     (gh*gw, H*W)  f32   fused bilinear operator
    # depth_ref: (B, H*W)      f32
    # out_ref:   (B, H*W)      f32
    m = jnp.exp(mesh_ref[...])                                           # EUP
    r = jnp.dot(m, k_ref[...], preferred_element_type=jnp.float32)      # MXU
    out_ref[...] = depth_ref[...] * r                                    # VPU


def mesh_deformer_forward(depth: jnp.ndarray, mesh: jnp.ndarray) -> jnp.ndarray:
    """depth: (B, 1, H, W), mesh: (B, 1, gh, gw) -> (B, 1, H, W) float32."""
    B, C, H, W = depth.shape
    Bm, Cm, gh, gw = mesh.shape
    assert C == 1 and Cm == 1 and Bm == B, "MeshDeformer mesh has a single channel"

    K = _fused_interp_operator(H, W, gh, gw)                 # (gh*gw, H*W)
    mesh_flat = mesh.reshape(B, gh * gw).astype(jnp.float32)
    depth_flat = depth.reshape(B, H * W).astype(jnp.float32)

    vmem_spec = pl.BlockSpec(memory_space=pltpu.MemorySpace.VMEM)
    out_flat = pl.pallas_call(
        _mesh_deform_kernel,
        out_shape=jax.ShapeDtypeStruct((B, H * W), jnp.float32),
        in_specs=[vmem_spec, vmem_spec, vmem_spec],
        out_specs=vmem_spec,
    )(mesh_flat, K, depth_flat)

    return out_flat.reshape(B, C, H, W)


# ----------------------------------------------------------------------------
# Pure-JAX reference (separable form) for validation
# ----------------------------------------------------------------------------
def _reference_forward(depth: jnp.ndarray, mesh: jnp.ndarray) -> jnp.ndarray:
    B, C, H, W = depth.shape
    _, _, gh, gw = mesh.shape
    ay = jnp.asarray(_interp_matrix_np(H, gh), dtype=jnp.float32)   # (H, gh)
    ax = jnp.asarray(_interp_matrix_np(W, gw), dtype=jnp.float32)   # (W, gw)
    mesh_res = jnp.einsum('yi,bcij,xj->bcyx', ay, jnp.exp(mesh), ax)
    return depth * mesh_res


if __name__ == "__main__":
    # Module __init__ shapes: image_size['down'] = (16, 16), opt.mesh_size = 8
    #   -> grid_h = grid_w = 8 + 1 = 9  (mesh parameter: (B, 1, 9, 9))
    B, H, W = 2, 16, 16
    gh, gw = 9, 9

    key = jax.random.PRNGKey(0)
    k_depth, k_mesh = jax.random.split(key)

    depth = jax.random.uniform(k_depth, (B, 1, H, W), dtype=jnp.float32) * 10.0 + 0.1
    # create_mesh() initializes the mesh parameter to zeros; use small random
    # values so the deterministic synthetic test exercises non-trivial compute.
    mesh = 0.1 * jax.random.normal(k_mesh, (B, 1, gh, gw), dtype=jnp.float32)

    out = mesh_deformer_forward(depth, mesh)
    out = jax.block_until_ready(out)

    assert out.shape == (B, 1, H, W) and out.dtype == jnp.float32

    ref = jax.block_until_ready(_reference_forward(depth, mesh))
    np.testing.assert_allclose(np.asarray(out), np.asarray(ref), rtol=1e-5, atol=1e-5)

    print("KERNEL_OK")
</pallas_src>

<mosaic_0001>
module attributes {stable_mosaic.version = 11 : i64} {
  func.func @_mesh_deform_kernel(%arg0: memref<2x81xf32, #tpu.memory_space<vmem>>, %arg1: memref<81x256xf32, #tpu.memory_space<vmem>>, %arg2: memref<2x256xf32, #tpu.memory_space<vmem>>, %arg3: memref<2x256xf32, #tpu.memory_space<vmem>>) attributes {dimension_semantics = [], scalar_prefetch = 0 : i64, scratch_operands = 0 : i64, tpu.core_type = #tpu.core_type<tc>} {
    %c0 = arith.constant 0 : index
    %c0_0 = arith.constant 0 : index
    %0 = vector.load %arg0[%c0, %c0_0] : memref<2x81xf32, #tpu.memory_space<vmem>>, vector<2x81xf32>
    %1 = math.exp %0 : vector<2x81xf32>
    %c0_1 = arith.constant 0 : index
    %c0_2 = arith.constant 0 : index
    %2 = vector.load %arg1[%c0_1, %c0_2] : memref<81x256xf32, #tpu.memory_space<vmem>>, vector<81x256xf32>
    %cst = arith.constant dense<0.000000e+00> : vector<2x256xf32>
    %3 = tpu.matmul %1, %2, %cst {dimension_numbers = #tpu.dot_dimension_numbers<[1], [0], [0], [1], [0, 0, 1, 1], [], []>} : vector<2x81xf32>, vector<81x256xf32>, vector<2x256xf32> -> vector<2x256xf32>
    %c0_3 = arith.constant 0 : index
    %c0_4 = arith.constant 0 : index
    %4 = vector.load %arg2[%c0_3, %c0_4] : memref<2x256xf32, #tpu.memory_space<vmem>>, vector<2x256xf32>
    %5 = arith.mulf %4, %3 : vector<2x256xf32>
    %c0_5 = arith.constant 0 : index
    %c0_6 = arith.constant 0 : index
    %6 = vector.load %arg3[%c0_5, %c0_6] : memref<2x256xf32, #tpu.memory_space<vmem>>, vector<2x256xf32>
    tpu.vector_store %arg3[%c0_5, %c0_6], %5 {strides = array<i32>} : memref<2x256xf32, #tpu.memory_space<vmem>>, vector<2x256xf32>,
    return
  }
}

</mosaic_0001>

<llo_original>
// kernel: tpu_custom_call.1
$region0: #{tpu_custom_call.1}
  #allocation0 [shape = 'u32[]', space=smem, size = 0x4, offset = 0x4, fixed_abs, tag = 'smem constant byte address 0x4 - core index']
  #allocation1 [shape = 'u32[144,128]{1,0:T(1,128)}', space=vmem, size = 0x12000, scoped, tag = 'internal scratch']
  %s0 = inlined_call_operand.hbm [shape: f32[2,81], index: 0, kind: input, shape index: {}]
  %s1 = inlined_call_operand.hbm [shape: f32[81,256], index: 1, kind: input, shape index: {}]
  %s2 = inlined_call_operand.vmem [shape: f32[2,256], index: 2, kind: input, shape index: {}]
  %s3 = inlined_call_operand.hbm [shape: f32[2,256], index: 3, kind: output, shape index: {}]
  %s4 = sld [smem:[#allocation0]]
  $region30: #{tpu_custom_call.1} parent=0
    _
  %s6 = ssub.s32 1, %s4
  %s7 = scalar_select 0, %s6, %s4
  $region1: #{tpu_custom_call.1} parent=0
    #allocation2 [shape = 'u8[1024]{0}', space=vmem, size = 0x400, scoped, tag = 'input window, operand 0, single buffered']
    #allocation3 [shape = 's32[1]{0}', space=sflag, size = 0x4, scoped, tag = 'scoped memory for tpu_custom_call.1']
    #allocation4 [shape = 's32[1]{0}', space=sflag, size = 0x4, scoped, tag = 'scoped memory for tpu_custom_call.1']
    #allocation5 [shape = 'u8[90112]{0}', space=vmem, size = 0x16000, scoped, tag = 'input window, operand 1, single buffered']
    #allocation6 [shape = 's32[1]{0}', space=sflag, size = 0x4, scoped, tag = 'scoped memory for tpu_custom_call.1']
    #allocation7 [shape = 'u8[2048]{0}', space=vmem, size = 0x800, scoped, tag = 'output window, operand 0, single buffered']
    %8 = vsyncpa [#allocation3], 0
    %9 = vsyncpa [#allocation6], 0
    %10 = vsyncpa [#allocation4], 0
    // Predicated region
    $region2: #{tpu_custom_call.1} parent=1 // pred_check
      _
    $region3: #{tpu_custom_call.1} parent=1 // pred_check_branch
      %12 = sbr.rel (0) target = $region5
    $region4: #{tpu_custom_call.1} parent=1 // pred_region
      %s14 = ssub.s32 32, 32
      %15 = vsyncadd [#allocation3], %s14
      %s17 = sshll.u32 [#allocation2], 4
      %s18 = int_to_ptr.vmem [resolvable:$true] %s17
      %20 = dma.hbm_to_vmem [thread:$0]  %s0, 32, %s18, [#allocation3]
    $region5: #{tpu_custom_call.1} parent=1 // pred_fallthru
      _
    // Predicated region
    $region6: #{tpu_custom_call.1} parent=1 // pred_check
      _
    $region7: #{tpu_custom_call.1} parent=1 // pred_check_branch
      %22 = sbr.rel (0) target = $region9
    $region8: #{tpu_custom_call.1} parent=1 // pred_region
      %s24 = ssub.s32 2816, 2816
      %25 = vsyncadd [#allocation6], %s24
      %s26 = sshll.u32 [#allocation5], 4
      %s27 = int_to_ptr.vmem [resolvable:$true] %s26
      %32 = dma.hbm_to_vmem [thread:$0]  %s1, 2816, %s27, [#allocation6], 256, 256, 16
    $region9: #{tpu_custom_call.1} parent=1 // pred_fallthru
      _
    // Predicated region
    $region10: #{tpu_custom_call.1} parent=1 // pred_check
      _
    $region11: #{tpu_custom_call.1} parent=1 // pred_check_branch
      %34 = sbr.rel (0) target = $region13
    $region12: #{tpu_custom_call.1} parent=1 // pred_region
      _
    $region13: #{tpu_custom_call.1} parent=1 // pred_fallthru
      _
    // Predicated region
    $region14: #{tpu_custom_call.1} parent=1 // pred_check
      _
    $region15: #{tpu_custom_call.1} parent=1 // pred_check_branch
      %36 = sbr.rel (0) target = $region17
    $region16: #{tpu_custom_call.1} parent=1 // pred_region
      %37 = dma.done [#allocation3], 32
    $region17: #{tpu_custom_call.1} parent=1 // pred_fallthru
      _
    // Predicated region
    $region18: #{tpu_custom_call.1} parent=1 // pred_check
      _
    $region19: #{tpu_custom_call.1} parent=1 // pred_check_branch
      %39 = sbr.rel (0) target = $region21
    $region20: #{tpu_custom_call.1} parent=1 // pred_region
      %40 = dma.done [#allocation6], 2816
    $region21: #{tpu_custom_call.1} parent=1 // pred_fallthru
      _
    %v41 = vld [vmem:[#allocation2] sm:$0x3]
    %v42 = vmul.f32 %v41, 1.442695
    %v43 = vpow.pop %v42
    %v44 = vld [vmem:[#allocation5] sm:$0xff]
    %v45 = vld [vmem:[#allocation5 + $0x8] sm:$0xff]
    %v46 = vld [vmem:[#allocation5 + $0x10] sm:$0xff]
    %v47 = vld [vmem:[#allocation5 + $0x18] sm:$0xff]
    %v48 = vld [vmem:[#allocation5 + $0x20] sm:$0xff]
    %v49 = vld [vmem:[#allocation5 + $0x28] sm:$0xff]
    %v50 = vld [vmem:[#allocation5 + $0x30] sm:$0xff]
    %v51 = vld [vmem:[#allocation5 + $0x38] sm:$0xff]
    %v52 = vld [vmem:[#allocation5 + $0x40] sm:$0xff]
    %v53 = vld [vmem:[#allocation5 + $0x48] sm:$0xff]
    %v54 = vld [vmem:[#allocation5 + $0x50] sm:$0xff]
    %v55 = vld [vmem:[#allocation5 + $0x58] sm:$0xff]
    %v56 = vld [vmem:[#allocation5 + $0x60] sm:$0xff]
    %v57 = vld [vmem:[#allocation5 + $0x68] sm:$0xff]
    %v58 = vld [vmem:[#allocation5 + $0x70] sm:$0xff]
    %v59 = vld [vmem:[#allocation5 + $0x78] sm:$0xff]
    %v60 = vld [vmem:[#allocation5 + $0x80] sm:$0xff]
    %v61 = vld [vmem:[#allocation5 + $0x88] sm:$0xff]
    %v62 = vld [vmem:[#allocation5 + $0x90] sm:$0xff]
    %v63 = vld [vmem:[#allocation5 + $0x98] sm:$0xff]
    %v64 = vld [vmem:[#allocation5 + $0xa0] sm:$0x1]
    %v65 = vld [vmem:[#allocation5 + $0xa8] sm:$0x1]
    %vm66 = vcmask 662528
    %v68 = vsel %vm66, %v43, 0
    %vm70 = vcmask 1040384
    %v72 = vsel %vm70, %v64, 0
    %v75 = vsel %vm70, %v65, 0
    %77 = vmatprep.subr.mxu0 %v45
    %78 = vmatpush1.msra.mxu0 %v44
    %79 = vmatprep.subr.mxu0 %v47
    %80 = vmatpush1.msra.mxu0 %v46
    %81 = vmatprep.subr.mxu0 %v49
    %82 = vmatpush1.msra.mxu0 %v48
    %83 = vmatprep.subr.mxu0 %v51
    %84 = vmatpush1.msra.mxu0 %v50
    %85 = vmatprep.subr.mxu0 %v53
    %86 = vmatpush1.msra.mxu0 %v52
    %87 = vmatprep.subr.mxu0 %v55
    %88 = vmatpush1.msra.mxu0 %v54
    %89 = vmatprep.subr.mxu0 %v57
    %90 = vmatpush1.msra.mxu0 %v56
    %91 = vmatprep.subr.mxu0 %v59
    %92 = vmatpush1.msra.mxu0 %v58
    %93 = vmatprep.subr.mxu0 %v61
    %94 = vmatpush1.msra.mxu0 %v60
    %95 = vmatprep.subr.mxu0 %v63
    %96 = vmatpush1.msra.mxu0 %v62
    %97 = vmatprep.subr.mxu0 %v75
    %98 = vmatpush1.msra.mxu0 %v72
    %99 = vmatprep.subr.mxu0 0.0
    %100 = vmatpush1.msra.mxu0 0.0
    %101 = vmatprep.subr.mxu0 0.0
    %102 = vmatpush1.msra.mxu0 0.0
    %103 = vmatprep.subr.mxu0 0.0
    %104 = vmatpush1.msra.mxu0 0.0
    %105 = vmatprep.subr.mxu0 0.0
    %106 = vmatpush1.msra.mxu0 0.0
    %107 = vmatprep.subr.mxu0 0.0
    %108 = vmatpush1.msra.mxu0 0.0
    %109 = vmatprep.subr.mxu0 0.0
    %110 = vmatpush1.msra.mxu0 0.0
    %111 = vmatprep.subr.mxu0 0.0
    %112 = vmatpush1.msra.mxu0 0.0
    %113 = vmatprep.subr.mxu0 0.0
    %114 = vmatpush1.msra.mxu0 0.0
    %115 = vmatprep.subr.mxu0 0.0
    %116 = vmatpush1.msra.mxu0 0.0
    %117 = vmatprep.subr.mxu0 0.0
    %118 = vmatpush1.msra.mxu0 0.0
    %119 = vmatprep.subr.mxu0 0.0
    %120 = vmatpush1.msra.mxu0 0.0
    %121 = vmatprep.subr.mxu0 0.0
    %122 = vmatpush1.msra.mxu0 0.0
    %123 = vmatprep.subr.mxu0 0.0
    %124 = vmatpush1.msra.mxu0 0.0
    %125 = vmatprep.subr.mxu0 0.0
    %126 = vmatpush1.msra.mxu0 0.0
    %127 = vmatprep.subr.mxu0 0.0
    %128 = vmatpush1.msra.mxu0 0.0
    %129 = vmatprep.subr.mxu0 0.0
    %130 = vmatpush1.msra.mxu0 0.0
    %131 = vmatprep.subr.mxu0 0.0
    %132 = vmatpush1.msra.mxu0 0.0
    %133 = vmatprep.subr.mxu0 0.0
    %134 = vmatpush1.msra.mxu0 0.0
    %135 = vmatprep.subr.mxu0 0.0
    %136 = vmatpush1.msra.mxu0 0.0
    %137 = vmatprep.subr.mxu0 0.0
    %138 = vmatpush1.msra.mxu0 0.0
    %139 = vmatprep.subr.mxu0 0.0
    %140 = vmatpush1.msra.mxu0 0.0
    %141 = vmatprep.mubr.f32.mxu0 0.0
    %142 = vmatmul.mubr.f32.gmra.mrb[0].mxu0 %v68
    %v143 = vpop.f32.mrb[0].mxu0
    %v144 = vadd.f32 0.0, %v143
    %v145 = vpop.f32.mrb[0].mxu0
    %v146 = vadd.f32 0.0, %v145
    %147 = vdwg.mxu0
    %v148 = vld [vmem:[%s2] sm:$0xf]
    %v151 = vcombine.low %v144, %v146
    %v153 = vunpack.c.l.s4 1983009808
    %v154 = vunpack.c.0.s8 %v153
    %v155 = vlaneseq
    %v156 = vshrl.u32 %v155, 7
    %v157 = vsub.s32 %v154, %v156
    %v158 = vrot.slane %v151, %v157
    %v160 = vmul.f32 %v148, %v158
    %161 = vst [vmem:[#allocation7] sm:$0xf] %v160
    // Predicated region
    $region22: #{tpu_custom_call.1} parent=1 // pred_check
      _
    $region23: #{tpu_custom_call.1} parent=1 // pred_check_branch
      %163 = sbr.rel (0) target = $region25
    $region24: #{tpu_custom_call.1} parent=1 // pred_region
      %s165 = ssub.s32 64, 64
      %166 = vsyncadd [#allocation4], %s165
      %s168 = sshll.u32 [#allocation7], 4
      %s169 = int_to_ptr.vmem [resolvable:$true] %s168
      %171 = dma.vmem_to_hbm [thread:$0]  %s169, 64, %s3, [#allocation4]
    $region25: #{tpu_custom_call.1} parent=1 // pred_fallthru
      _
    // Predicated region
    $region26: #{tpu_custom_call.1} parent=1 // pred_check
      _
    $region27: #{tpu_custom_call.1} parent=1 // pred_check_branch
      %173 = sbr.rel (0) target = $region29
    $region28: #{tpu_custom_call.1} parent=1 // pred_region
      %174 = dma.done [#allocation4], 64
    $region29: #{tpu_custom_call.1} parent=1 // pred_fallthru
      _
    %175 = vsyncpa [#allocation3], 1
    %176 = vsyncpa [#allocation6], 1
    %177 = vsyncpa [#allocation4], 1

</llo_original>
